<compile_context>
chip_gen: v7x
topology: tpu7x:2x2x1
jax: 0.10.0
libtpu: 0.0.40
codegen_flags: <defaults>
</compile_context>

<pallas_src>
import jax
import jax.numpy as jnp
from jax import lax
from jax.experimental import pallas as pl
from jax.experimental.pallas import tpu as pltpu


# ---------------------------------------------------------------------------
# Small-table path: whole table resident in VMEM, gather via one-hot matmul.
# ---------------------------------------------------------------------------
def _emb_onehot_kernel(idx_ref, table_ref, out_ref):
    """idx_ref: VMEM (TB,1) int32; table_ref: VMEM (n,nz); out_ref: VMEM (TB,nz)."""
    n = table_ref.shape[0]
    tb = out_ref.shape[0]
    iota = lax.broadcasted_iota(jnp.int32, (tb, n), 1)
    onehot = (idx_ref[...] == iota).astype(table_ref.dtype)
    out_ref[...] = jnp.dot(
        onehot, table_ref[...], preferred_element_type=jnp.float32
    ).astype(out_ref.dtype)


# ---------------------------------------------------------------------------
# Large-table path: table in HBM, per-row DMAs straight into the output tile.
# ---------------------------------------------------------------------------
def _emb_dma_kernel(idx_ref, table_hbm, out_ref, copy_sem):
    """idx_ref: SMEM (B_pad,) int32 (scalar prefetch); table_hbm: HBM (n,nz);
    out_ref: VMEM (TB,nz); copy_sem: single shared DMA semaphore."""
    TB = out_ref.shape[0]
    base = pl.program_id(0) * TB

    def issue(b, carry):
        row = idx_ref[base + b]
        pltpu.make_async_copy(
            table_hbm.at[pl.ds(row, 1), :],   # one embedding row in HBM
            out_ref.at[pl.ds(b, 1), :],       # land directly in the out tile
            copy_sem,                         # ONE shared semaphore
        ).start()
        return carry

    # Keep descriptor issue rolling without a 128-way Python unroll.
    lax.fori_loop(0, TB, issue, 0, unroll=8)

    # Single bulk wait: the DMA semaphore counts bytes; the TB row copies sum
    # to exactly the size of out_ref, so one wait sized for out_ref covers all.
    pltpu.make_async_copy(out_ref, out_ref, copy_sem).wait()


# ---------------------------------------------------------------------------
# Wrapper
# ---------------------------------------------------------------------------
_SMALL_TABLE_BYTES = 4 * 1024 * 1024      # whole-table-in-VMEM threshold
_ONEHOT_VMEM_BUDGET = 4 * 1024 * 1024     # cap on the (TB, n) one-hot tile
_OUT_TILE_VMEM_BUDGET = 8 * 1024 * 1024   # cap on 2 x (TB, nz) out buffers


def _sublane(dtype):
    itemsize = jnp.dtype(dtype).itemsize
    return {4: 8, 2: 16, 1: 32}.get(itemsize, 8)


def netz_forward(table, idx, *, small_table_bytes=_SMALL_TABLE_BYTES):
    """Pallas implementation of _netZ.forward: emb(idx).squeeze()."""
    table = jnp.asarray(table)
    n, nz = table.shape
    itemsize = jnp.dtype(table.dtype).itemsize

    idx = jnp.asarray(idx, dtype=jnp.int32).reshape(-1)
    B = idx.shape[0]
    # TPU does no runtime bounds checking for these accesses; clamp defensively.
    # (PyTorch nn.Embedding raises on OOB; valid inputs are unaffected.)
    idx = jnp.clip(idx, 0, n - 1)

    # dtype-aware sublane-full padding of the batch.
    SUB = _sublane(table.dtype)
    B_pad = max(SUB, -(-B // SUB) * SUB)

    # Batch tile: as large as possible (amortizes per-step overhead) but keep
    # the double-buffered output tile inside a conservative VMEM budget so the
    # same sizing also works on v7x (64 MiB physical / 32 MiB scoped default).
    tb_budget = max(SUB, (_OUT_TILE_VMEM_BUDGET // (2 * nz * itemsize)) // SUB * SUB)
    TB = min(B_pad, 128, tb_budget)
    TB = max(SUB, (TB // SUB) * SUB)
    B_pad = -(-B_pad // TB) * TB
    # Padding rows gather row 0; they are sliced off before returning.
    idx_pad = jnp.zeros((B_pad,), jnp.int32).at[:B].set(idx)

    grid = (B_pad // TB,)
    # NOTE: "parallel" vs "arbitrary" is near-neutral on v5e/v6e; on v7x
    # pltpu.CORE_PARALLEL on this axis would split batch tiles across the
    # two TensorCores.
    cparams = pltpu.CompilerParams(dimension_semantics=("parallel",))

    use_small = (
        n * nz * itemsize <= small_table_bytes
        and TB * n * 4 <= _ONEHOT_VMEM_BUDGET
    )

    if use_small:
        gathered = pl.pallas_call(
            _emb_onehot_kernel,
            out_shape=jax.ShapeDtypeStruct((B_pad, nz), table.dtype),
            grid=grid,
            in_specs=[
                pl.BlockSpec((TB, 1), lambda i: (i, 0)),   # indices (VMEM)
                pl.BlockSpec((n, nz), lambda i: (0, 0)),   # whole table, resident
            ],
            out_specs=pl.BlockSpec((TB, nz), lambda i: (i, 0)),
            compiler_params=cparams,
        )(idx_pad.reshape(B_pad, 1), table)
    else:
        gathered = pl.pallas_call(
            _emb_dma_kernel,
            out_shape=jax.ShapeDtypeStruct((B_pad, nz), table.dtype),
            grid_spec=pltpu.PrefetchScalarGridSpec(
                num_scalar_prefetch=1,                     # idx lands in SMEM
                grid=grid,
                in_specs=[pl.BlockSpec(memory_space=pl.ANY)],  # table stays in HBM
                out_specs=pl.BlockSpec((TB, nz), lambda i, idx_ref: (i, 0)),
                scratch_shapes=[pltpu.SemaphoreType.DMA],  # ONE shared DMA sem
            ),
            compiler_params=cparams,
        )(idx_pad, table)

    # Drop padding rows, then PyTorch's .squeeze() (drops all size-1 dims).
    return jnp.squeeze(gathered[:B])


if __name__ == "__main__":
    key = jax.random.PRNGKey(0)
    k_w, k_i, k_w2, k_i2 = jax.random.split(key, 4)

    # --- Config A: module-sized demo, _netZ(nz=128, n=64), batch of 8 -------
    # Takes the small-table (VMEM one-hot) path.
    n, nz, B = 64, 128, 8
    table = jax.random.normal(k_w, (n, nz), dtype=jnp.float32)  # nn.Embedding ~N(0,1)
    idx = jax.random.randint(k_i, (B,), 0, n, dtype=jnp.int32)

    z = jax.block_until_ready(netz_forward(table, idx))
    ref = jnp.squeeze(table[idx])
    assert z.shape == (B, nz), z.shape
    assert z.dtype == table.dtype
    assert jnp.allclose(z, ref, atol=1e-6), "small-table path mismatch"

    # Scalar index -> .squeeze() drops the singleton batch dim (torch parity).
    z0 = jax.block_until_ready(netz_forward(table, jnp.int32(3)))
    assert z0.shape == (nz,), z0.shape
    assert jnp.allclose(z0, table[3], atol=1e-6), "scalar-index mismatch"

    # --- Config B: force the HBM-resident per-row-DMA path (multi-tile grid) -
    n2, nz2, B2 = 512, 128, 200
    table2 = jax.random.normal(k_w2, (n2, nz2), dtype=jnp.float32)
    idx2 = jax.random.randint(k_i2, (B2,), 0, n2, dtype=jnp.int32)

    z2 = jax.block_until_ready(netz_forward(table2, idx2, small_table_bytes=0))
    ref2 = table2[idx2]
    assert z2.shape == (B2, nz2), z2.shape
    assert jnp.allclose(z2, ref2), "dma path mismatch"

    print("KERNEL_OK")
</pallas_src>

<mosaic_0001>
module attributes {stable_mosaic.version = 11 : i64} {
  func.func @_emb_onehot_kernel(%arg0: i32, %arg1: memref<8x1xi32, #tpu.memory_space<vmem>>, %arg2: memref<64x128xf32, #tpu.memory_space<vmem>>, %arg3: memref<8x128xf32, #tpu.memory_space<vmem>>) attributes {dimension_semantics = [#tpu.dimension_semantics<parallel>], iteration_bounds = array<i64: 1>, scalar_prefetch = 0 : i64, scratch_operands = 0 : i64, tpu.core_type = #tpu.core_type<tc>, window_params = [{transform_indices = @transform_0, window_bounds = array<i64: 8, 1>}, {pipeline_mode = #tpu.pipeline_mode<synchronous>, transform_indices = @transform_1, window_bounds = array<i64: 64, 128>}, {transform_indices = @transform_2, window_bounds = array<i64: 8, 128>}]} {
    %0 = tpu.iota {dimensions = array<i32: 1>} : vector<8x64xi32>
    %c0 = arith.constant 0 : index
    %c0_0 = arith.constant 0 : index
    %1 = vector.load %arg1[%c0, %c0_0] : memref<8x1xi32, #tpu.memory_space<vmem>>, vector<8x1xi32>
    %2 = vector.broadcast %1 : vector<8x1xi32> to vector<8x64xi32>
    %3 = arith.cmpi eq, %2, %0 : vector<8x64xi32>
    %4 = arith.extui %3 : vector<8x64xi1> to vector<8x64xi32>
    %5 = arith.sitofp %4 : vector<8x64xi32> to vector<8x64xf32>
    %c0_1 = arith.constant 0 : index
    %c0_2 = arith.constant 0 : index
    %6 = vector.load %arg2[%c0_1, %c0_2] : memref<64x128xf32, #tpu.memory_space<vmem>>, vector<64x128xf32>
    %cst = arith.constant dense<0.000000e+00> : vector<8x128xf32>
    %7 = tpu.matmul %5, %6, %cst {dimension_numbers = #tpu.dot_dimension_numbers<[1], [0], [0], [1], [0, 0, 1, 1], [], []>} : vector<8x64xf32>, vector<64x128xf32>, vector<8x128xf32> -> vector<8x128xf32>
    %c0_3 = arith.constant 0 : index
    %c0_4 = arith.constant 0 : index
    %8 = vector.load %arg3[%c0_3, %c0_4] : memref<8x128xf32, #tpu.memory_space<vmem>>, vector<8x128xf32>
    tpu.vector_store %arg3[%c0_3, %c0_4], %7 {strides = array<i32>} : memref<8x128xf32, #tpu.memory_space<vmem>>, vector<8x128xf32>,
    return
  }
  func.func @transform_0(%arg0: i32) -> (i32, i32) {
    %c0_i32 = arith.constant 0 : i32
    %c0_i32_0 = arith.constant 0 : i32
    return %arg0, %c0_i32 : i32, i32
  }
  func.func @transform_1(%arg0: i32) -> (i32, i32) {
    %c0_i32 = arith.constant 0 : i32
    %c0_i32_0 = arith.constant 0 : i32
    %c0_i32_1 = arith.constant 0 : i32
    return %c0_i32, %c0_i32_0 : i32, i32
  }
  func.func @transform_2(%arg0: i32) -> (i32, i32) {
    %c0_i32 = arith.constant 0 : i32
    %c0_i32_0 = arith.constant 0 : i32
    return %arg0, %c0_i32 : i32, i32
  }
}

</mosaic_0001>

<llo_original>
// kernel: tpu_custom_call.1
$region0: #{tpu_custom_call.1}
  #allocation0 [shape = 'u32[]', space=smem, size = 0x4, offset = 0x4, fixed_abs, tag = 'smem constant byte address 0x4 - core index']
  #allocation1 [shape = 'u32[144,128]{1,0:T(1,128)}', space=vmem, size = 0x12000, scoped, tag = 'internal scratch']
  %s0 = inlined_call_operand.vmem [shape: s32[8,1], index: 0, kind: input, shape index: {}]
  %s1 = inlined_call_operand.hbm [shape: f32[64,128], index: 1, kind: input, shape index: {}]
  %s2 = inlined_call_operand.hbm [shape: f32[8,128], index: 2, kind: output, shape index: {}]
  %s3 = sld [smem:[#allocation0]]
  $region22: #{tpu_custom_call.1} parent=0
    _
  %s5 = ssub.s32 1, %s3
  %s6 = scalar_select 0, %s5, %s3
  $region1: #{tpu_custom_call.1} parent=0
    #allocation2 [shape = 'u8[32768]{0}', space=vmem, size = 0x8000, scoped, tag = 'input window, operand 1, single buffered']
    #allocation3 [shape = 's32[1]{0}', space=sflag, size = 0x4, scoped, tag = 'scoped memory for tpu_custom_call.1']
    #allocation4 [shape = 's32[1]{0}', space=sflag, size = 0x4, scoped, tag = 'scoped memory for tpu_custom_call.1']
    #allocation5 [shape = 'u8[4096]{0}', space=vmem, size = 0x1000, scoped, tag = 'output window, operand 0, single buffered']
    %7 = vsyncpa [#allocation3], 0
    %8 = vsyncpa [#allocation4], 0
    // Predicated region
    $region2: #{tpu_custom_call.1} parent=1 // pred_check
      _
    $region3: #{tpu_custom_call.1} parent=1 // pred_check_branch
      %10 = sbr.rel (0) target = $region5
    $region4: #{tpu_custom_call.1} parent=1 // pred_region
      _
    $region5: #{tpu_custom_call.1} parent=1 // pred_fallthru
      _
    // Predicated region
    $region6: #{tpu_custom_call.1} parent=1 // pred_check
      _
    $region7: #{tpu_custom_call.1} parent=1 // pred_check_branch
      %12 = sbr.rel (0) target = $region9
    $region8: #{tpu_custom_call.1} parent=1 // pred_region
      %s14 = ssub.s32 1024, 1024
      %15 = vsyncadd [#allocation3], %s14
      %s16 = sshll.u32 [#allocation2], 4
      %s17 = int_to_ptr.vmem [resolvable:$true] %s16
      %22 = dma.hbm_to_vmem [thread:$0]  %s1, 1024, %s17, [#allocation3], 128, 128, 8
    $region9: #{tpu_custom_call.1} parent=1 // pred_fallthru
      _
    // Predicated region
    $region10: #{tpu_custom_call.1} parent=1 // pred_check
      _
    $region11: #{tpu_custom_call.1} parent=1 // pred_check_branch
      %24 = sbr.rel (0) target = $region13
    $region12: #{tpu_custom_call.1} parent=1 // pred_region
      %25 = dma.done [#allocation3], 1024
    $region13: #{tpu_custom_call.1} parent=1 // pred_fallthru
      _
    %v26 = vlaneseq
    %v27 = vand.u32 %v26, 127
    %v28 = vld [vmem:[%s0] sm:$0xff]
    %29 = vset.pattern.permute.xlu0 0
    %30 = vperm.xlu0 %29, %v28
    %v31 = vpop.permute.xlu0 %30
    %vm32 = vcmp.eq.s32.totalorder %v31, %v27
    %v33 = vsel %vm32, 1, 0
    %v34 = vcvt.s32.f32 %v33
    %v35 = vld [vmem:[#allocation2] sm:$0xff]
    %v36 = vld [vmem:[#allocation2 + $0x8] sm:$0xff]
    %v37 = vld [vmem:[#allocation2 + $0x10] sm:$0xff]
    %v38 = vld [vmem:[#allocation2 + $0x18] sm:$0xff]
    %v39 = vld [vmem:[#allocation2 + $0x20] sm:$0xff]
    %v40 = vld [vmem:[#allocation2 + $0x28] sm:$0xff]
    %v41 = vld [vmem:[#allocation2 + $0x30] sm:$0xff]
    %v42 = vld [vmem:[#allocation2 + $0x38] sm:$0xff]
    %vm43 = vcmask 523264
    %v45 = vsel %vm43, %v34, 0
    %47 = vmatprep.subr.mxu0 0.0
    %48 = vmatpush1.msra.mxu0 %v35
    %49 = vmatprep.subr.mxu0 0.0
    %50 = vmatpush1.msra.mxu0 %v36
    %51 = vmatprep.subr.mxu0 0.0
    %52 = vmatpush1.msra.mxu0 %v37
    %53 = vmatprep.subr.mxu0 0.0
    %54 = vmatpush1.msra.mxu0 %v38
    %55 = vmatprep.subr.mxu0 0.0
    %56 = vmatpush1.msra.mxu0 %v39
    %57 = vmatprep.subr.mxu0 0.0
    %58 = vmatpush1.msra.mxu0 %v40
    %59 = vmatprep.subr.mxu0 0.0
    %60 = vmatpush1.msra.mxu0 %v41
    %61 = vmatprep.subr.mxu0 0.0
    %62 = vmatpush1.msra.mxu0 %v42
    %63 = vmatprep.subr.mxu0 0.0
    %64 = vmatpush1.msra.mxu0 0.0
    %65 = vmatprep.subr.mxu0 0.0
    %66 = vmatpush1.msra.mxu0 0.0
    %67 = vmatprep.subr.mxu0 0.0
    %68 = vmatpush1.msra.mxu0 0.0
    %69 = vmatprep.subr.mxu0 0.0
    %70 = vmatpush1.msra.mxu0 0.0
    %71 = vmatprep.subr.mxu0 0.0
    %72 = vmatpush1.msra.mxu0 0.0
    %73 = vmatprep.subr.mxu0 0.0
    %74 = vmatpush1.msra.mxu0 0.0
    %75 = vmatprep.subr.mxu0 0.0
    %76 = vmatpush1.msra.mxu0 0.0
    %77 = vmatprep.subr.mxu0 0.0
    %78 = vmatpush1.msra.mxu0 0.0
    %79 = vmatprep.subr.mxu0 0.0
    %80 = vmatpush1.msra.mxu0 0.0
    %81 = vmatprep.subr.mxu0 0.0
    %82 = vmatpush1.msra.mxu0 0.0
    %83 = vmatprep.subr.mxu0 0.0
    %84 = vmatpush1.msra.mxu0 0.0
    %85 = vmatprep.subr.mxu0 0.0
    %86 = vmatpush1.msra.mxu0 0.0
    %87 = vmatprep.subr.mxu0 0.0
    %88 = vmatpush1.msra.mxu0 0.0
    %89 = vmatprep.subr.mxu0 0.0
    %90 = vmatpush1.msra.mxu0 0.0
    %91 = vmatprep.subr.mxu0 0.0
    %92 = vmatpush1.msra.mxu0 0.0
    %93 = vmatprep.subr.mxu0 0.0
    %94 = vmatpush1.msra.mxu0 0.0
    %95 = vmatprep.subr.mxu0 0.0
    %96 = vmatpush1.msra.mxu0 0.0
    %97 = vmatprep.subr.mxu0 0.0
    %98 = vmatpush1.msra.mxu0 0.0
    %99 = vmatprep.subr.mxu0 0.0
    %100 = vmatpush1.msra.mxu0 0.0
    %101 = vmatprep.subr.mxu0 0.0
    %102 = vmatpush1.msra.mxu0 0.0
    %103 = vmatprep.subr.mxu0 0.0
    %104 = vmatpush1.msra.mxu0 0.0
    %105 = vmatprep.subr.mxu0 0.0
    %106 = vmatpush1.msra.mxu0 0.0
    %107 = vmatprep.subr.mxu0 0.0
    %108 = vmatpush1.msra.mxu0 0.0
    %109 = vmatprep.subr.mxu0 0.0
    %110 = vmatpush1.msra.mxu0 0.0
    %111 = vmatprep.mubr.f32.mxu0 0.0
    %112 = vmatmul.mubr.f32.gmra.mrb[0].mxu0 %v45
    %v113 = vpop.f32.mrb[0].mxu0
    %v114 = vadd.f32 0.0, %v113
    %v115 = vpop.f32.mrb[0].mxu0
    %116 = vdwg.mxu0
    %117 = vst [vmem:[#allocation5] sm:$0xff] %v114
    // Predicated region
    $region14: #{tpu_custom_call.1} parent=1 // pred_check
      _
    $region15: #{tpu_custom_call.1} parent=1 // pred_check_branch
      %119 = sbr.rel (0) target = $region17
    $region16: #{tpu_custom_call.1} parent=1 // pred_region
      %s121 = ssub.s32 128, 128
      %122 = vsyncadd [#allocation4], %s121
      %s124 = sshll.u32 [#allocation5], 4
      %s125 = int_to_ptr.vmem [resolvable:$true] %s124
      %127 = dma.vmem_to_hbm [thread:$0]  %s125, 128, %s2, [#allocation4]
    $region17: #{tpu_custom_call.1} parent=1 // pred_fallthru
      _
    // Predicated region
    $region18: #{tpu_custom_call.1} parent=1 // pred_check
      _
    $region19: #{tpu_custom_call.1} parent=1 // pred_check_branch
      %129 = sbr.rel (0) target = $region21
    $region20: #{tpu_custom_call.1} parent=1 // pred_region
      %130 = dma.done [#allocation4], 128
    $region21: #{tpu_custom_call.1} parent=1 // pred_fallthru
      _
    %131 = vsyncpa [#allocation3], 1
    %132 = vsyncpa [#allocation4], 1

</llo_original>
